<compile_context>
chip_gen: v5e
topology: v5e:2x2
jax: 0.10.0
libtpu: 0.0.40
codegen_flags: <defaults>
</compile_context>

<pallas_src>
import functools
import math

import numpy as np
import jax
import jax.numpy as jnp
from jax import lax
from jax.experimental import pallas as pl
from jax.experimental.pallas import tpu as pltpu

EPS = 1e-5


# ----------------------------------------------------------------------------
# Fused BasicBlock1D kernel (channels-last tiles)
# ----------------------------------------------------------------------------
def _basic_block_kernel(stride, lo, has_shortcut, *refs):
    """conv3x3+bn+relu -> conv3x3+bn -> (+conv1x1+bn | +identity) -> relu.

    Activations are (L, C) tiles, so every conv tap is a
    (L_out, C_in) x (C_in, C_out) matmul and the output lane dim is C_out.
    """
    if has_shortcut:
        (x_ref, w1_ref, b1_ref, w2_ref, b2_ref, wd_ref, bd_ref,
         o_ref, h_ref) = refs
    else:
        x_ref, w1_ref, b1_ref, w2_ref, b2_ref, o_ref, h_ref = refs

    def x_rows(k):  # padded-x rows k, k+stride, ..., k+stride*(lo-1)
        if stride == 1:
            return x_ref[k:k + lo, :]
        return x_ref[pl.ds(k, lo, stride), :]

    # --- conv1 (k=3, pad=1, stride=s) + bn1 + relu ---------------------------
    acc = jnp.dot(x_rows(0), w1_ref[0], preferred_element_type=jnp.float32)
    acc += jnp.dot(x_rows(1), w1_ref[1], preferred_element_type=jnp.float32)
    acc += jnp.dot(x_rows(2), w1_ref[2], preferred_element_type=jnp.float32)
    acc = jnp.maximum(acc + b1_ref[...], 0.0)

    # Stage conv1 output, zero-padded by 1 row on each side, in VMEM scratch.
    h_ref[...] = jnp.zeros_like(h_ref)
    h_ref[1:1 + lo, :] = acc

    # --- conv2 (k=3, pad=1, stride=1) + bn2 ----------------------------------
    acc2 = jnp.dot(h_ref[0:lo, :], w2_ref[0],
                   preferred_element_type=jnp.float32)
    acc2 += jnp.dot(h_ref[1:1 + lo, :], w2_ref[1],
                    preferred_element_type=jnp.float32)
    acc2 += jnp.dot(h_ref[2:2 + lo, :], w2_ref[2],
                    preferred_element_type=jnp.float32)
    acc2 += b2_ref[...]

    # --- shortcut + residual add + relu --------------------------------------
    # Padded row (1 + stride*l) is unpadded row (stride*l): exactly x_rows(1).
    if has_shortcut:
        identity = jnp.dot(x_rows(1), wd_ref[...],
                           preferred_element_type=jnp.float32) + bd_ref[...]
    else:
        identity = x_rows(1).astype(jnp.float32)

    o_ref[...] = jnp.maximum(acc2 + identity, 0.0).astype(o_ref.dtype)


# ----------------------------------------------------------------------------
# Wrapper: BN folding, layout plumbing, pallas_call
# ----------------------------------------------------------------------------
def _fold_bn(bn):
    scale = bn["gamma"] * lax.rsqrt(bn["var"] + EPS)
    bias = bn["beta"] - bn["mean"] * scale
    return scale, bias


def basic_block1d_forward(x, params):
    """x: (N, C_in, L) float32 in PyTorch NCL layout. Returns (N, C_out, L_out)."""
    stride = params["stride"]
    w1 = params["conv1"]                      # (C_out, C_in, 3)
    w2 = params["conv2"]                      # (C_out, C_out, 3)
    n, c_in, length = x.shape
    c_out = w1.shape[0]
    lo = (length + 2 - 3) // stride + 1
    lp = length + 2

    s1, b1 = _fold_bn(params["bn1"])
    s2, b2 = _fold_bn(params["bn2"])
    # Fold BN scale into conv weights; layout (K, C_in, C_out) for (L,Ci)x(Ci,Co).
    w1f = jnp.transpose(w1, (2, 1, 0)) * s1[None, None, :]
    w2f = jnp.transpose(w2, (2, 1, 0)) * s2[None, None, :]

    # Channels-last + zero pad along L (the only wrapper-side activation prep).
    x_pad = jnp.pad(jnp.transpose(x, (0, 2, 1)), ((0, 0), (1, 1), (0, 0)))

    has_shortcut = params["shortcut"] is not None
    args = [x_pad, w1f, b1[None, :], w2f, b2[None, :]]
    in_specs = [
        pl.BlockSpec((None, lp, c_in), lambda i: (i, 0, 0)),
        pl.BlockSpec((3, c_in, c_out), lambda i: (0, 0, 0)),
        pl.BlockSpec((1, c_out), lambda i: (0, 0)),
        pl.BlockSpec((3, c_out, c_out), lambda i: (0, 0, 0)),
        pl.BlockSpec((1, c_out), lambda i: (0, 0)),
    ]
    if has_shortcut:
        sd, bd = _fold_bn(params["shortcut"]["bn"])
        wdf = params["shortcut"]["conv"][:, :, 0].T * sd[None, :]   # (C_in, C_out)
        args += [wdf, bd[None, :]]
        in_specs += [
            pl.BlockSpec((c_in, c_out), lambda i: (0, 0)),
            pl.BlockSpec((1, c_out), lambda i: (0, 0)),
        ]

    out_nlc = pl.pallas_call(
        functools.partial(_basic_block_kernel, stride, lo, has_shortcut),
        out_shape=jax.ShapeDtypeStruct((n, lo, c_out), x.dtype),
        grid=(n,),
        in_specs=in_specs,
        out_specs=pl.BlockSpec((None, lo, c_out), lambda i: (i, 0, 0)),
        scratch_shapes=[pltpu.VMEM((lo + 2, c_out), jnp.float32)],
        compiler_params=pltpu.CompilerParams(
            dimension_semantics=("parallel",)),
    )(*args)
    return jnp.transpose(out_nlc, (0, 2, 1))


# ----------------------------------------------------------------------------
# Deterministic parameter construction (mirrors the PyTorch module shapes)
# ----------------------------------------------------------------------------
def _kaiming_conv(key, shape):
    c_out, _, k = shape
    std = math.sqrt(2.0 / (c_out * k))
    return std * jax.random.normal(key, shape, dtype=jnp.float32)


def _rand_bn(key, c):
    kg, kb, km, kv = jax.random.split(key, 4)
    return {
        "gamma": jax.random.uniform(kg, (c,), jnp.float32, 0.8, 1.2),
        "beta": 0.2 * jax.random.normal(kb, (c,), jnp.float32),
        "mean": 0.2 * jax.random.normal(km, (c,), jnp.float32),
        "var": jax.random.uniform(kv, (c,), jnp.float32, 0.8, 1.2),
    }


def init_basic_block(key, in_planes, planes, stride):
    k1, k2, k3, kb1, kb2, kb3 = jax.random.split(key, 6)
    params = {
        "stride": stride,
        "conv1": _kaiming_conv(k1, (planes, in_planes, 3)),
        "bn1": _rand_bn(kb1, planes),
        "conv2": _kaiming_conv(k2, (planes, planes, 3)),
        "bn2": _rand_bn(kb2, planes),
        "shortcut": None,
    }
    if stride != 1 or in_planes != planes:
        params["shortcut"] = {
            "conv": _kaiming_conv(k3, (planes, in_planes, 1)),
            "bn": _rand_bn(kb3, planes),
        }
    return params


# ----------------------------------------------------------------------------
# Pure-JAX reference (f32 HIGHEST precision) for the correctness check
# ----------------------------------------------------------------------------
def _conv1d_ref(x, w, stride, padding):
    return lax.conv_general_dilated(
        x, w, window_strides=(stride,), padding=[(padding, padding)],
        dimension_numbers=("NCH", "OIH", "NCH"),
        precision=lax.Precision.HIGHEST)


def _bn_ref(x, bn):
    scale, bias = _fold_bn(bn)
    return x * scale[None, :, None] + bias[None, :, None]


def basic_block1d_ref(x, params):
    out = jax.nn.relu(_bn_ref(
        _conv1d_ref(x, params["conv1"], params["stride"], 1), params["bn1"]))
    out = _bn_ref(_conv1d_ref(out, params["conv2"], 1, 1), params["bn2"])
    if params["shortcut"] is not None:
        identity = _bn_ref(
            _conv1d_ref(x, params["shortcut"]["conv"], params["stride"], 0),
            params["shortcut"]["bn"])
    else:
        identity = x
    return jax.nn.relu(out + identity)


# ----------------------------------------------------------------------------
if __name__ == "__main__":
    key = jax.random.PRNGKey(0)
    kpa, kpb, kxa, kxb = jax.random.split(key, 4)

    # Block A: stride 2 + channel change -> 1x1-conv shortcut path.
    params_a = init_basic_block(kpa, in_planes=8, planes=16, stride=2)
    x_a = jax.random.normal(kxa, (2, 8, 32), dtype=jnp.float32)

    # Block B: stride 1, same channels -> identity shortcut path.
    params_b = init_basic_block(kpb, in_planes=16, planes=16, stride=1)
    x_b = jax.random.normal(kxb, (2, 16, 16), dtype=jnp.float32)

    out_a = basic_block1d_forward(x_a, params_a)
    out_b = basic_block1d_forward(x_b, params_b)
    jax.block_until_ready((out_a, out_b))

    ref_a = basic_block1d_ref(x_a, params_a)
    ref_b = basic_block1d_ref(x_b, params_b)
    # Tolerance sized for default (bf16-pass) MXU precision vs f32 reference.
    np.testing.assert_allclose(np.asarray(out_a), np.asarray(ref_a),
                               rtol=2e-2, atol=5e-2)
    np.testing.assert_allclose(np.asarray(out_b), np.asarray(ref_b),
                               rtol=2e-2, atol=5e-2)
    print("KERNEL_OK")
</pallas_src>

<mosaic_0001>
module attributes {stable_mosaic.version = 11 : i64} {
  func.func @_basic_block_kernel(%arg0: i32, %arg1: memref<1x34x8xf32, #tpu.memory_space<vmem>>, %arg2: memref<3x8x16xf32, #tpu.memory_space<vmem>>, %arg3: memref<1x16xf32, #tpu.memory_space<vmem>>, %arg4: memref<3x16x16xf32, #tpu.memory_space<vmem>>, %arg5: memref<1x16xf32, #tpu.memory_space<vmem>>, %arg6: memref<8x16xf32, #tpu.memory_space<vmem>>, %arg7: memref<1x16xf32, #tpu.memory_space<vmem>>, %arg8: memref<1x16x16xf32, #tpu.memory_space<vmem>>, %arg9: memref<18x16xf32, #tpu.memory_space<vmem>>) attributes {dimension_semantics = [#tpu.dimension_semantics<parallel>], iteration_bounds = array<i64: 2>, scalar_prefetch = 0 : i64, scratch_operands = 1 : i64, tpu.core_type = #tpu.core_type<tc>, window_params = [{transform_indices = @transform_0, window_bounds = array<i64: 1, 34, 8>}, {pipeline_mode = #tpu.pipeline_mode<synchronous>, transform_indices = @transform_1, window_bounds = array<i64: 3, 8, 16>}, {pipeline_mode = #tpu.pipeline_mode<synchronous>, transform_indices = @transform_2, window_bounds = array<i64: 1, 16>}, {pipeline_mode = #tpu.pipeline_mode<synchronous>, transform_indices = @transform_3, window_bounds = array<i64: 3, 16, 16>}, {pipeline_mode = #tpu.pipeline_mode<synchronous>, transform_indices = @transform_4, window_bounds = array<i64: 1, 16>}, {pipeline_mode = #tpu.pipeline_mode<synchronous>, transform_indices = @transform_5, window_bounds = array<i64: 8, 16>}, {pipeline_mode = #tpu.pipeline_mode<synchronous>, transform_indices = @transform_6, window_bounds = array<i64: 1, 16>}, {transform_indices = @transform_7, window_bounds = array<i64: 1, 16, 16>}]} {
    %c0 = arith.constant 0 : index
    %c0_0 = arith.constant 0 : index
    %c0_1 = arith.constant 0 : index
    %0 = tpu.strided_load %arg1[%c0, %c0_0, %c0_1] {strides = array<i32: 1, 2, 1>} : memref<1x34x8xf32, #tpu.memory_space<vmem>>, vector<1x16x8xf32>
    %1 = vector.shape_cast %0 : vector<1x16x8xf32> to vector<16x8xf32>
    %c0_2 = arith.constant 0 : index
    %c0_3 = arith.constant 0 : index
    %c0_4 = arith.constant 0 : index
    %2 = vector.load %arg2[%c0_2, %c0_3, %c0_4] : memref<3x8x16xf32, #tpu.memory_space<vmem>>, vector<1x8x16xf32>
    %3 = vector.shape_cast %2 : vector<1x8x16xf32> to vector<8x16xf32>
    %cst = arith.constant dense<0.000000e+00> : vector<16x16xf32>
    %4 = tpu.matmul %1, %3, %cst {dimension_numbers = #tpu.dot_dimension_numbers<[1], [0], [0], [1], [0, 0, 1, 1], [], []>} : vector<16x8xf32>, vector<8x16xf32>, vector<16x16xf32> -> vector<16x16xf32>
    %c0_5 = arith.constant 0 : index
    %c1 = arith.constant 1 : index
    %c0_6 = arith.constant 0 : index
    %5 = tpu.strided_load %arg1[%c0_5, %c1, %c0_6] {strides = array<i32: 1, 2, 1>} : memref<1x34x8xf32, #tpu.memory_space<vmem>>, vector<1x16x8xf32>
    %6 = vector.shape_cast %5 : vector<1x16x8xf32> to vector<16x8xf32>
    %c1_7 = arith.constant 1 : index
    %c0_8 = arith.constant 0 : index
    %c0_9 = arith.constant 0 : index
    %7 = vector.load %arg2[%c1_7, %c0_8, %c0_9] : memref<3x8x16xf32, #tpu.memory_space<vmem>>, vector<1x8x16xf32>
    %8 = vector.shape_cast %7 : vector<1x8x16xf32> to vector<8x16xf32>
    %cst_10 = arith.constant dense<0.000000e+00> : vector<16x16xf32>
    %9 = tpu.matmul %6, %8, %cst_10 {dimension_numbers = #tpu.dot_dimension_numbers<[1], [0], [0], [1], [0, 0, 1, 1], [], []>} : vector<16x8xf32>, vector<8x16xf32>, vector<16x16xf32> -> vector<16x16xf32>
    %10 = arith.addf %4, %9 : vector<16x16xf32>
    %c0_11 = arith.constant 0 : index
    %c2 = arith.constant 2 : index
    %c0_12 = arith.constant 0 : index
    %11 = tpu.strided_load %arg1[%c0_11, %c2, %c0_12] {strides = array<i32: 1, 2, 1>} : memref<1x34x8xf32, #tpu.memory_space<vmem>>, vector<1x16x8xf32>
    %12 = vector.shape_cast %11 : vector<1x16x8xf32> to vector<16x8xf32>
    %c2_13 = arith.constant 2 : index
    %c0_14 = arith.constant 0 : index
    %c0_15 = arith.constant 0 : index
    %13 = vector.load %arg2[%c2_13, %c0_14, %c0_15] : memref<3x8x16xf32, #tpu.memory_space<vmem>>, vector<1x8x16xf32>
    %14 = vector.shape_cast %13 : vector<1x8x16xf32> to vector<8x16xf32>
    %cst_16 = arith.constant dense<0.000000e+00> : vector<16x16xf32>
    %15 = tpu.matmul %12, %14, %cst_16 {dimension_numbers = #tpu.dot_dimension_numbers<[1], [0], [0], [1], [0, 0, 1, 1], [], []>} : vector<16x8xf32>, vector<8x16xf32>, vector<16x16xf32> -> vector<16x16xf32>
    %16 = arith.addf %10, %15 : vector<16x16xf32>
    %c0_17 = arith.constant 0 : index
    %c0_18 = arith.constant 0 : index
    %17 = vector.load %arg3[%c0_17, %c0_18] : memref<1x16xf32, #tpu.memory_space<vmem>>, vector<1x16xf32>
    %18 = vector.broadcast %17 : vector<1x16xf32> to vector<16x16xf32>
    %19 = arith.addf %16, %18 : vector<16x16xf32>
    %cst_19 = arith.constant 0.000000e+00 : f32
    %20 = vector.broadcast %cst_19 : f32 to vector<16x16xf32>
    %21 = arith.maximumf %19, %20 : vector<16x16xf32>
    %cst_20 = arith.constant 0.000000e+00 : f32
    %22 = vector.broadcast %cst_20 : f32 to vector<18x16xf32>
    %c0_21 = arith.constant 0 : index
    %c0_22 = arith.constant 0 : index
    %23 = vector.load %arg9[%c0_21, %c0_22] : memref<18x16xf32, #tpu.memory_space<vmem>>, vector<18x16xf32>
    tpu.vector_store %arg9[%c0_21, %c0_22], %22 {strides = array<i32>} : memref<18x16xf32, #tpu.memory_space<vmem>>, vector<18x16xf32>,
    %c1_23 = arith.constant 1 : index
    %c0_24 = arith.constant 0 : index
    %24 = vector.load %arg9[%c1_23, %c0_24] : memref<18x16xf32, #tpu.memory_space<vmem>>, vector<16x16xf32>
    tpu.vector_store %arg9[%c1_23, %c0_24], %21 {strides = array<i32>} : memref<18x16xf32, #tpu.memory_space<vmem>>, vector<16x16xf32>,
    %c0_25 = arith.constant 0 : index
    %c0_26 = arith.constant 0 : index
    %25 = vector.load %arg9[%c0_25, %c0_26] : memref<18x16xf32, #tpu.memory_space<vmem>>, vector<16x16xf32>
    %c0_27 = arith.constant 0 : index
    %c0_28 = arith.constant 0 : index
    %c0_29 = arith.constant 0 : index
    %26 = vector.load %arg4[%c0_27, %c0_28, %c0_29] : memref<3x16x16xf32, #tpu.memory_space<vmem>>, vector<1x16x16xf32>
    %27 = vector.shape_cast %26 : vector<1x16x16xf32> to vector<16x16xf32>
    %cst_30 = arith.constant dense<0.000000e+00> : vector<16x16xf32>
    %28 = tpu.matmul %25, %27, %cst_30 {dimension_numbers = #tpu.dot_dimension_numbers<[1], [0], [0], [1], [0, 0, 1, 1], [], []>} : vector<16x16xf32>, vector<16x16xf32>, vector<16x16xf32> -> vector<16x16xf32>
    %c1_31 = arith.constant 1 : index
    %c0_32 = arith.constant 0 : index
    %29 = vector.load %arg9[%c1_31, %c0_32] : memref<18x16xf32, #tpu.memory_space<vmem>>, vector<16x16xf32>
    %c1_33 = arith.constant 1 : index
    %c0_34 = arith.constant 0 : index
    %c0_35 = arith.constant 0 : index
    %30 = vector.load %arg4[%c1_33, %c0_34, %c0_35] : memref<3x16x16xf32, #tpu.memory_space<vmem>>, vector<1x16x16xf32>
    %31 = vector.shape_cast %30 : vector<1x16x16xf32> to vector<16x16xf32>
    %cst_36 = arith.constant dense<0.000000e+00> : vector<16x16xf32>
    %32 = tpu.matmul %29, %31, %cst_36 {dimension_numbers = #tpu.dot_dimension_numbers<[1], [0], [0], [1], [0, 0, 1, 1], [], []>} : vector<16x16xf32>, vector<16x16xf32>, vector<16x16xf32> -> vector<16x16xf32>
    %33 = arith.addf %28, %32 : vector<16x16xf32>
    %c2_37 = arith.constant 2 : index
    %c0_38 = arith.constant 0 : index
    %34 = vector.load %arg9[%c2_37, %c0_38] : memref<18x16xf32, #tpu.memory_space<vmem>>, vector<16x16xf32>
    %c2_39 = arith.constant 2 : index
    %c0_40 = arith.constant 0 : index
    %c0_41 = arith.constant 0 : index
    %35 = vector.load %arg4[%c2_39, %c0_40, %c0_41] : memref<3x16x16xf32, #tpu.memory_space<vmem>>, vector<1x16x16xf32>
    %36 = vector.shape_cast %35 : vector<1x16x16xf32> to vector<16x16xf32>
    %cst_42 = arith.constant dense<0.000000e+00> : vector<16x16xf32>
    %37 = tpu.matmul %34, %36, %cst_42 {dimension_numbers = #tpu.dot_dimension_numbers<[1], [0], [0], [1], [0, 0, 1, 1], [], []>} : vector<16x16xf32>, vector<16x16xf32>, vector<16x16xf32> -> vector<16x16xf32>
    %38 = arith.addf %33, %37 : vector<16x16xf32>
    %c0_43 = arith.constant 0 : index
    %c0_44 = arith.constant 0 : index
    %39 = vector.load %arg5[%c0_43, %c0_44] : memref<1x16xf32, #tpu.memory_space<vmem>>, vector<1x16xf32>
    %40 = vector.broadcast %39 : vector<1x16xf32> to vector<16x16xf32>
    %41 = arith.addf %38, %40 : vector<16x16xf32>
    %c0_45 = arith.constant 0 : index
    %c1_46 = arith.constant 1 : index
    %c0_47 = arith.constant 0 : index
    %42 = tpu.strided_load %arg1[%c0_45, %c1_46, %c0_47] {strides = array<i32: 1, 2, 1>} : memref<1x34x8xf32, #tpu.memory_space<vmem>>, vector<1x16x8xf32>
    %43 = vector.shape_cast %42 : vector<1x16x8xf32> to vector<16x8xf32>
    %c0_48 = arith.constant 0 : index
    %c0_49 = arith.constant 0 : index
    %44 = vector.load %arg6[%c0_48, %c0_49] : memref<8x16xf32, #tpu.memory_space<vmem>>, vector<8x16xf32>
    %cst_50 = arith.constant dense<0.000000e+00> : vector<16x16xf32>
    %45 = tpu.matmul %43, %44, %cst_50 {dimension_numbers = #tpu.dot_dimension_numbers<[1], [0], [0], [1], [0, 0, 1, 1], [], []>} : vector<16x8xf32>, vector<8x16xf32>, vector<16x16xf32> -> vector<16x16xf32>
    %c0_51 = arith.constant 0 : index
    %c0_52 = arith.constant 0 : index
    %46 = vector.load %arg7[%c0_51, %c0_52] : memref<1x16xf32, #tpu.memory_space<vmem>>, vector<1x16xf32>
    %47 = vector.broadcast %46 : vector<1x16xf32> to vector<16x16xf32>
    %48 = arith.addf %45, %47 : vector<16x16xf32>
    %49 = arith.addf %41, %48 : vector<16x16xf32>
    %cst_53 = arith.constant 0.000000e+00 : f32
    %50 = vector.broadcast %cst_53 : f32 to vector<16x16xf32>
    %51 = arith.maximumf %49, %50 : vector<16x16xf32>
    %c0_54 = arith.constant 0 : index
    %c0_55 = arith.constant 0 : index
    %c0_56 = arith.constant 0 : index
    %52 = vector.load %arg8[%c0_54, %c0_55, %c0_56] : memref<1x16x16xf32, #tpu.memory_space<vmem>>, vector<1x16x16xf32>
    %53 = vector.shape_cast %52 : vector<1x16x16xf32> to vector<16x16xf32>
    %54 = vector.shape_cast %51 : vector<16x16xf32> to vector<1x16x16xf32>
    tpu.vector_store %arg8[%c0_54, %c0_55, %c0_56], %54 {strides = array<i32>} : memref<1x16x16xf32, #tpu.memory_space<vmem>>, vector<1x16x16xf32>,
    return
  }
  func.func @transform_0(%arg0: i32) -> (i32, i32, i32) {
    %c0_i32 = arith.constant 0 : i32
    %c0_i32_0 = arith.constant 0 : i32
    %c0_i32_1 = arith.constant 0 : i32
    return %arg0, %c0_i32, %c0_i32_0 : i32, i32, i32
  }
  func.func @transform_1(%arg0: i32) -> (i32, i32, i32) {
    %c0_i32 = arith.constant 0 : i32
    %c0_i32_0 = arith.constant 0 : i32
    %c0_i32_1 = arith.constant 0 : i32
    %c0_i32_2 = arith.constant 0 : i32
    return %c0_i32, %c0_i32_0, %c0_i32_1 : i32, i32, i32
  }
  func.func @transform_2(%arg0: i32) -> (i32, i32) {
    %c0_i32 = arith.constant 0 : i32
    %c0_i32_0 = arith.constant 0 : i32
    %c0_i32_1 = arith.constant 0 : i32
    return %c0_i32, %c0_i32_0 : i32, i32
  }
  func.func @transform_3(%arg0: i32) -> (i32, i32, i32) {
    %c0_i32 = arith.constant 0 : i32
    %c0_i32_0 = arith.constant 0 : i32
    %c0_i32_1 = arith.constant 0 : i32
    %c0_i32_2 = arith.constant 0 : i32
    return %c0_i32, %c0_i32_0, %c0_i32_1 : i32, i32, i32
  }
  func.func @transform_4(%arg0: i32) -> (i32, i32) {
    %c0_i32 = arith.constant 0 : i32
    %c0_i32_0 = arith.constant 0 : i32
    %c0_i32_1 = arith.constant 0 : i32
    return %c0_i32, %c0_i32_0 : i32, i32
  }
  func.func @transform_5(%arg0: i32) -> (i32, i32) {
    %c0_i32 = arith.constant 0 : i32
    %c0_i32_0 = arith.constant 0 : i32
    %c0_i32_1 = arith.constant 0 : i32
    return %c0_i32, %c0_i32_0 : i32, i32
  }
  func.func @transform_6(%arg0: i32) -> (i32, i32) {
    %c0_i32 = arith.constant 0 : i32
    %c0_i32_0 = arith.constant 0 : i32
    %c0_i32_1 = arith.constant 0 : i32
    return %c0_i32, %c0_i32_0 : i32, i32
  }
  func.func @transform_7(%arg0: i32) -> (i32, i32, i32) {
    %c0_i32 = arith.constant 0 : i32
    %c0_i32_0 = arith.constant 0 : i32
    %c0_i32_1 = arith.constant 0 : i32
    return %arg0, %c0_i32, %c0_i32_0 : i32, i32, i32
  }
}

</mosaic_0001>

<llo_original>
// kernel: tpu_custom_call.1
$region0: #{tpu_custom_call.1}
  #allocation0 [shape = 'u32[]', space=smem, size = 0x4, offset = 0x4, fixed_abs, tag = 'smem constant byte address 0x4 - core index']
  #allocation1 [shape = 'u32[72,128]{1,0:T(1,128)}', space=vmem, size = 0x9000, scoped, tag = 'internal scratch']
  #allocation2 [shape = 'f32[18,16]{1,0:T(8,128)}', space=vmem, size = 0x3000, scoped, tag = 'scratch operand']
  %s0 = inlined_call_operand.vmem [shape: f32[2,34,8], index: 0, kind: input, shape index: {}]
  %s1 = inlined_call_operand.vmem [shape: f32[3,8,16], index: 1, kind: input, shape index: {}]
  %s2 = inlined_call_operand.vmem [shape: f32[1,16], index: 2, kind: input, shape index: {}]
  %s3 = inlined_call_operand.vmem [shape: f32[3,16,16], index: 3, kind: input, shape index: {}]
  %s4 = inlined_call_operand.vmem [shape: f32[1,16], index: 4, kind: input, shape index: {}]
  %s5 = inlined_call_operand.vmem [shape: f32[8,16], index: 5, kind: input, shape index: {}]
  %s6 = inlined_call_operand.vmem [shape: f32[1,16], index: 6, kind: input, shape index: {}]
  %s7 = inlined_call_operand.hbm [shape: f32[2,16,16], index: 7, kind: output, shape index: {}]
  %s8 = sld [smem:[#allocation0]]
  $region61: #{tpu_custom_call.1} parent=0
    _
  %s10 = ssub.s32 1, %s8
  %s11 = scalar_select 0, %s10, %s8
  $region1: #{tpu_custom_call.1} parent=0
    #allocation3 [shape = 'u8[16384]{0}', space=vmem, size = 0x4000, scoped, tag = 'output window, operand 0']
    #allocation4 [shape = 's32[2]{0}', space=sflag, size = 0x8, scoped, tag = 'scoped memory for tpu_custom_call.1']
    %12 = vsyncpa [#allocation4], 0
    %s13 = scalar_lea.sflag [#allocation4], 1
    %14 = vsyncpa %s13, 0
    loop: start=0, step=1, limit=4
    $region2: #{tpu_custom_call.1} parent=1 // loop_pre_header
      _
    $region3: #{tpu_custom_call.1} parent=1 // loop_header
      %s16 = sphi 0, %s20
      %p17 = scmp.ge.s32.totalorder %s16, 4
      %s26 = sphi 0, %s28
      %s29 = sphi 0, %s26
      %s30 = sphi 0, %s29
      %s46 = sphi 0, %s30
      %s50 = sphi 0, %s50
      %s52 = sphi 0, %s50
      %s53 = sphi 0, %s52
      %s67 = sphi 0, %s53
      %s71 = sphi 0, %s71
      %s73 = sphi 0, %s71
      %s74 = sphi 0, %s73
      %s88 = sphi 0, %s74
      %s92 = sphi 0, %s92
      %s94 = sphi 0, %s92
      %s95 = sphi 0, %s94
      %s109 = sphi 0, %s95
      %s113 = sphi 0, %s113
      %s115 = sphi 0, %s113
      %s116 = sphi 0, %s115
      %s130 = sphi 0, %s116
      %s134 = sphi 0, %s134
      %s136 = sphi 0, %s134
      %s137 = sphi 0, %s136
      %s151 = sphi 0, %s137
      %s155 = sphi 0, %s155
      %s157 = sphi 0, %s155
      %s158 = sphi 0, %s157
      %s172 = sphi 0, %s158
      %s178 = sphi 0, %s180
      %s181 = sphi 0, %s178
      %s182 = sphi 0, %s181
      %s198 = sphi 0, %s182
    $region4: #{tpu_custom_call.1} parent=1 // loop_header_branch
      %19 = sbr.rel (%p17) target = $region8
    $region5: #{tpu_custom_call.1} parent=1 // loop_body
      %s21 = ssub.s32 %s16, 1
      %s22 = ssub.s32 %s16, 2
      %s23 = sadd.s32 %s16, 1
      %s24 = ssub.s32 %s16, %s23
      %p25 = scmp.eq.s32.totalorder %s24, 0
      %s27 = sadd.s32 %s26, 1
      %s28 = scalar_select %p25, %s26, %s27
      %p31 = pneg %p25
      %p32 = scmp.eq.s32.totalorder %s16, 1
      %p33 = por %p31, %p32
      %p34 = scmp.ne.s32.totalorder %s26, %s29
      %p35 = scmp.eq.s32.totalorder %s16, 0
      %p36 = por %p34, %p35
      %p37 = scmp.ne.s32.totalorder %s26, %s29
      %p38 = scmp.eq.s32.totalorder %s21, 1
      %p39 = por %p37, %p38
      %p40 = scmp.ne.s32.totalorder %s29, %s30
      %p41 = scmp.eq.s32.totalorder %s21, 0
      %p42 = por %p40, %p41
      %p43 = scmp.ne.s32.totalorder %s29, %s30
      %p44 = scmp.eq.s32.totalorder %s22, 1
      %p45 = por %p43, %p44
      %p47 = scmp.ne.s32.totalorder %s30, %s46
      %p48 = scmp.eq.s32.totalorder %s22, 0
      %p49 = por %p47, %p48
      %s51 = sadd.s32 %s50, 1
      %p54 = scmp.eq.s32.totalorder %s16, 1
      %p55 = scmp.ne.s32.totalorder %s50, %s52
      %p56 = scmp.eq.s32.totalorder %s16, 0
      %p57 = por %p55, %p56
      %p58 = scmp.ne.s32.totalorder %s50, %s52
      %p59 = scmp.eq.s32.totalorder %s21, 1
      %p60 = por %p58, %p59
      %p61 = scmp.ne.s32.totalorder %s52, %s53
      %p62 = scmp.eq.s32.totalorder %s21, 0
      %p63 = por %p61, %p62
      %p64 = scmp.ne.s32.totalorder %s52, %s53
      %p65 = scmp.eq.s32.totalorder %s22, 1
      %p66 = por %p64, %p65
      %p68 = scmp.ne.s32.totalorder %s53, %s67
      %p69 = scmp.eq.s32.totalorder %s22, 0
      %p70 = por %p68, %p69
      %s72 = sadd.s32 %s71, 1
      %p75 = scmp.eq.s32.totalorder %s16, 1
      %p76 = scmp.ne.s32.totalorder %s71, %s73
      %p77 = scmp.eq.s32.totalorder %s16, 0
      %p78 = por %p76, %p77
      %p79 = scmp.ne.s32.totalorder %s71, %s73
      %p80 = scmp.eq.s32.totalorder %s21, 1
      %p81 = por %p79, %p80
      %p82 = scmp.ne.s32.totalorder %s73, %s74
      %p83 = scmp.eq.s32.totalorder %s21, 0
      %p84 = por %p82, %p83
      %p85 = scmp.ne.s32.totalorder %s73, %s74
      %p86 = scmp.eq.s32.totalorder %s22, 1
      %p87 = por %p85, %p86
      %p89 = scmp.ne.s32.totalorder %s74, %s88
      %p90 = scmp.eq.s32.totalorder %s22, 0
      %p91 = por %p89, %p90
      %s93 = sadd.s32 %s92, 1
      %p96 = scmp.eq.s32.totalorder %s16, 1
      %p97 = scmp.ne.s32.totalorder %s92, %s94
      %p98 = scmp.eq.s32.totalorder %s16, 0
      %p99 = por %p97, %p98
      %p100 = scmp.ne.s32.totalorder %s92, %s94
      %p101 = scmp.eq.s32.totalorder %s21, 1
      %p102 = por %p100, %p101
      %p103 = scmp.ne.s32.totalorder %s94, %s95
      %p104 = scmp.eq.s32.totalorder %s21, 0
      %p105 = por %p103, %p104
      %p106 = scmp.ne.s32.totalorder %s94, %s95
      %p107 = scmp.eq.s32.totalorder %s22, 1
      %p108 = por %p106, %p107
      %p110 = scmp.ne.s32.totalorder %s95, %s109
      %p111 = scmp.eq.s32.totalorder %s22, 0
      %p112 = por %p110, %p111
      %s114 = sadd.s32 %s113, 1
      %p117 = scmp.eq.s32.totalorder %s16, 1
      %p118 = scmp.ne.s32.totalorder %s113, %s115
      %p119 = scmp.eq.s32.totalorder %s16, 0
      %p120 = por %p118, %p119
      %p121 = scmp.ne.s32.totalorder %s113, %s115
      %p122 = scmp.eq.s32.totalorder %s21, 1
      %p123 = por %p121, %p122
      %p124 = scmp.ne.s32.totalorder %s115, %s116
      %p125 = scmp.eq.s32.totalorder %s21, 0
      %p126 = por %p124, %p125
      %p127 = scmp.ne.s32.totalorder %s115, %s116
      %p128 = scmp.eq.s32.totalorder %s22, 1
      %p129 = por %p127, %p128
      %p131 = scmp.ne.s32.totalorder %s116, %s130
      %p132 = scmp.eq.s32.totalorder %s22, 0
      %p133 = por %p131, %p132
      %s135 = sadd.s32 %s134, 1
      %p138 = scmp.eq.s32.totalorder %s16, 1
      %p139 = scmp.ne.s32.totalorder %s134, %s136
      %p140 = scmp.eq.s32.totalorder %s16, 0
      %p141 = por %p139, %p140
      %p142 = scmp.ne.s32.totalorder %s134, %s136
      %p143 = scmp.eq.s32.totalorder %s21, 1
      %p144 = por %p142, %p143
      %p145 = scmp.ne.s32.totalorder %s136, %s137
      %p146 = scmp.eq.s32.totalorder %s21, 0
      %p147 = por %p145, %p146
      %p148 = scmp.ne.s32.totalorder %s136, %s137
      %p149 = scmp.eq.s32.totalorder %s22, 1
      %p150 = por %p148, %p149
      %p152 = scmp.ne.s32.totalorder %s137, %s151
      %p153 = scmp.eq.s32.totalorder %s22, 0
      %p154 = por %p152, %p153
      %s156 = sadd.s32 %s155, 1
      %p159 = scmp.eq.s32.totalorder %s16, 1
      %p160 = scmp.ne.s32.totalorder %s155, %s157
      %p161 = scmp.eq.s32.totalorder %s16, 0
      %p162 = por %p160, %p161
      %p163 = scmp.ne.s32.totalorder %s155, %s157
      %p164 = scmp.eq.s32.totalorder %s21, 1
      %p165 = por %p163, %p164
      %p166 = scmp.ne.s32.totalorder %s157, %s158
      %p167 = scmp.eq.s32.totalorder %s21, 0
      %p168 = por %p166, %p167
      %p169 = scmp.ne.s32.totalorder %s157, %s158
      %p170 = scmp.eq.s32.totalorder %s22, 1
      %p171 = por %p169, %p170
      %p173 = scmp.ne.s32.totalorder %s158, %s172
      %p174 = scmp.eq.s32.totalorder %s22, 0
      %p175 = por %p173, %p174
      %s176 = ssub.s32 %s16, %s23
      %p177 = scmp.eq.s32.totalorder %s176, 0
      %s179 = sadd.s32 %s178, 1
      %s180 = scalar_select %p177, %s178, %s179
      %p183 = pneg %p177
      %p184 = scmp.eq.s32.totalorder %s16, 1
      %p185 = por %p183, %p184
      %p186 = scmp.ne.s32.totalorder %s178, %s181
      %p187 = scmp.eq.s32.totalorder %s16, 0
      %p188 = por %p186, %p187
      %p189 = scmp.ne.s32.totalorder %s178, %s181
      %p190 = scmp.eq.s32.totalorder %s21, 1
      %p191 = por %p189, %p190
      %p192 = scmp.ne.s32.totalorder %s181, %s182
      %p193 = scmp.eq.s32.totalorder %s21, 0
      %p194 = por %p192, %p193
      %p195 = scmp.ne.s32.totalorder %s181, %s182
      %p196 = scmp.eq.s32.totalorder %s22, 1
      %p197 = por %p195, %p196
      %p199 = scmp.ne.s32.totalorder %s182, %s198
      %p200 = scmp.eq.s32.totalorder %s22, 0
      %p201 = por %p199, %p200
      %p202 = scmp.le.s32.totalorder 1, %s16
      %p203 = scmp.lt.s32.totalorder %s16, 3
      %p204 = pnand %p202, %p203
      %p205 = pneg %p204
      // Predicated region
      $region9: #{tpu_custom_call.1} parent=5 // pred_check
        _
      $region10: #{tpu_custom_call.1} parent=5 // pred_check_branch
        %207 = sbr.rel (%p204) target = $region12
      $region11: #{tpu_custom_call.1} parent=5 // pred_region
        %s208 = ssub.s32 %s16, 1
        // Predicated region
        $region13: #{tpu_custom_call.1} parent=11 // pred_check
          %p209 = pneg %p63
        $region14: #{tpu_custom_call.1} parent=11 // pred_check_branch
          %211 = sbr.rel (%p209) target = $region16
        $region15: #{tpu_custom_call.1} parent=11 // pred_region
          _
        $region16: #{tpu_custom_call.1} parent=11 // pred_fallthru
          _
        // Predicated region
        $region17: #{tpu_custom_call.1} parent=11 // pred_check
          %p212 = pneg %p84
        $region18: #{tpu_custom_call.1} parent=11 // pred_check_branch
          %214 = sbr.rel (%p212) target = $region20
        $region19: #{tpu_custom_call.1} parent=11 // pred_region
          _
        $region20: #{tpu_custom_call.1} parent=11 // pred_fallthru
          _
        // Predicated region
        $region21: #{tpu_custom_call.1} parent=11 // pred_check
          %p215 = pneg %p105
        $region22: #{tpu_custom_call.1} parent=11 // pred_check_branch
          %217 = sbr.rel (%p215) target = $region24
        $region23: #{tpu_custom_call.1} parent=11 // pred_region
          _
        $region24: #{tpu_custom_call.1} parent=11 // pred_fallthru
          _
        // Predicated region
        $region25: #{tpu_custom_call.1} parent=11 // pred_check
          %p218 = pneg %p126
        $region26: #{tpu_custom_call.1} parent=11 // pred_check_branch
          %220 = sbr.rel (%p218) target = $region28
        $region27: #{tpu_custom_call.1} parent=11 // pred_region
          _
        $region28: #{tpu_custom_call.1} parent=11 // pred_fallthru
          _
        // Predicated region
        $region29: #{tpu_custom_call.1} parent=11 // pred_check
          %p221 = pneg %p147
        $region30: #{tpu_custom_call.1} parent=11 // pred_check_branch
          %223 = sbr.rel (%p221) target = $region32
        $region31: #{tpu_custom_call.1} parent=11 // pred_region
          _
        $region32: #{tpu_custom_call.1} parent=11 // pred_fallthru
          _
        // Predicated region
        $region33: #{tpu_custom_call.1} parent=11 // pred_check
          %p224 = pneg %p168
        $region34: #{tpu_custom_call.1} parent=11 // pred_check_branch
          %226 = sbr.rel (%p224) target = $region36
        $region35: #{tpu_custom_call.1} parent=11 // pred_region
          _
        $region36: #{tpu_custom_call.1} parent=11 // pred_fallthru
          _
      $region12: #{tpu_custom_call.1} parent=5 // pred_fallthru
        _
      %p227 = scmp.lt.s32.totalorder %s16, 2
      // Predicated region
      $region37: #{tpu_custom_call.1} parent=5 // pred_check
        %p228 = pneg %p227
      $region38: #{tpu_custom_call.1} parent=5 // pred_check_branch
        %230 = sbr.rel (%p228) target = $region40
      $region39: #{tpu_custom_call.1} parent=5 // pred_region
        // Predicated region
        $region41: #{tpu_custom_call.1} parent=39 // pred_check
          %p231 = pneg %p36
        $region42: #{tpu_custom_call.1} parent=39 // pred_check_branch
          %233 = sbr.rel (%p231) target = $region44
        $region43: #{tpu_custom_call.1} parent=39 // pred_region
          %p234 = scmp.lt.s32.totalorder %s16, 1
          %s235 = scalar_select %p234, %s16, 1
          %s236 = smul.addr %s235, 5
          %s237 = smul.addr %s236, 8
          %s238 = scalar_lea.vmem %s0, %s237
        $region44: #{tpu_custom_call.1} parent=39 // pred_fallthru
          _
      $region40: #{tpu_custom_call.1} parent=5 // pred_fallthru
        _
      %p239 = scmp.le.s32.totalorder 1, %s16
      %p240 = scmp.lt.s32.totalorder %s16, 3
      %p241 = pnand %p239, %p240
      %p242 = pneg %p241
      // Predicated region
      $region45: #{tpu_custom_call.1} parent=5 // pred_check
        _
      $region46: #{tpu_custom_call.1} parent=5 // pred_check_branch
        %244 = sbr.rel (%p241) target = $region48
      $region47: #{tpu_custom_call.1} parent=5 // pred_region
        %s245 = ssub.s32 %s16, 1
        %p246 = scmp.lt.s32.totalorder %s21, 1
        %s247 = scalar_select %p246, %s21, 1
        %s248 = smul.addr %s247, 5
        %s249 = smul.addr %s248, 8
        %s250 = scalar_lea.vmem %s0, %s249
        %p251 = pneg %p42
        %p252 = pneg %p39
        %p253 = pneg %p63
        %p254 = pneg %p60
        %p255 = pneg %p84
        %p256 = pneg %p81
        %p257 = pneg %p105
        %p258 = pneg %p102
        %p259 = pneg %p126
        %p260 = pneg %p123
        %p261 = pneg %p147
        %p262 = pneg %p144
        %p263 = pneg %p168
        %p264 = pneg %p165
        %p265 = pneg %p194
        %p266 = pneg %p191
        %s267 = sand.u32 %s181, 1
        %s268 = scalar_lea.sflag [#allocation4], %s267
        %s269 = sand.u32 %s181, 1
        %s270 = smul.addr %s269, 16
        %s271 = scalar_lea.vmem [#allocation3], %s270
        %p272 = scmp.lt.s32.totalorder %s21, 1
        %s273 = scalar_select %p272, %s21, 1
        %s274 = smul.addr %s273, 5
        %s275 = smul.addr %s274, 8
        %s276 = scalar_lea.vmem %s0, %s275
        %v277 = vld [vmem:[%s276] ss:$2 sm:$0xff]
        %s278 = scalar_lea.vmem %s276, 16
        %v279 = vld [vmem:[%s278] ss:$2 sm:$0xff]
        %v280 = vld [vmem:[%s1] sm:$0xff]
        %s281 = scalar_lea.vmem %s276, 1
        %v282 = vld [vmem:[%s281] ss:$2 sm:$0xff]
        %s283 = scalar_lea.vmem %s276, 17
        %v284 = vld [vmem:[%s283] ss:$2 sm:$0xff]
        %s285 = scalar_lea.vmem %s1, 8
        %v286 = vld [vmem:[%s285] sm:$0xff]
        %vm287 = vcmask 64512
        %v289 = vsel %vm287, %v282, 0
        %v292 = vsel %vm287, %v284, 0
        %294 = vmatpush.msra.mxu0 0.0
        %295 = vmatpush.msra.mxu0 0.0
        %296 = vmatpush.msra.mxu0 0.0
        %297 = vmatpush.msra.mxu0 0.0
        %298 = vmatpush.msra.mxu0 0.0
        %299 = vmatpush.msra.mxu0 0.0
        %300 = vmatpush.msra.mxu0 0.0
        %301 = vmatpush.msra.mxu0 0.0
        %302 = vmatpush.msra.mxu0 0.0
        %303 = vmatpush.msra.mxu0 0.0
        %304 = vmatpush.msra.mxu0 0.0
        %305 = vmatpush.msra.mxu0 0.0
        %306 = vmatpush.msra.mxu0 0.0
        %307 = vmatpush.msra.mxu0 0.0
        %308 = vmatpush.msra.mxu0 0.0
        %309 = vmatpush.msra.mxu0 %v286
        %310 = vmatmul.f32.gmra.mxu0 %v289
        %v311 = vpop.f32.mrf.mxu0
        %v312 = vadd.f32 0.0, %v311
        %313 = vmatmul.f32.gmra.mxu0 %v292
        %v314 = vpop.f32.mrf.mxu0
        %v315 = vadd.f32 0.0, %v314
        %316 = vdwg.mxu0
        %v318 = vsel %vm287, %v277, 0
        %v321 = vsel %vm287, %v279, 0
        %323 = vmatpush.msra.mxu0 0.0
        %324 = vmatpush.msra.mxu0 0.0
        %325 = vmatpush.msra.mxu0 0.0
        %326 = vmatpush.msra.mxu0 0.0
        %327 = vmatpush.msra.mxu0 0.0
        %328 = vmatpush.msra.mxu0 0.0
        %329 = vmatpush.msra.mxu0 0.0
        %330 = vmatpush.msra.mxu0 0.0
        %331 = vmatpush.msra.mxu0 0.0
        %332 = vmatpush.msra.mxu0 0.0
        %333 = vmatpush.msra.mxu0 0.0
        %334 = vmatpush.msra.mxu0 0.0
        %335 = vmatpush.msra.mxu0 0.0
        %336 = vmatpush.msra.mxu0 0.0
        %337 = vmatpush.msra.mxu0 0.0
        %338 = vmatpush.msra.mxu0 %v280
        %339 = vmatmul.f32.gmra.mxu0 %v318
        %v340 = vpop.f32.mrf.mxu0
        %v341 = vadd.f32 %v312, %v340
        %342 = vmatmul.f32.gmra.mxu0 %v321
        %v343 = vpop.f32.mrf.mxu0
        %v344 = vadd.f32 %v315, %v343
        %345 = vdwg.mxu0
        %s346 = scalar_lea.vmem %s276, 2
        %v347 = vld [vmem:[%s346] ss:$2 sm:$0xff]
        %s348 = scalar_lea.vmem %s276, 18
        %v349 = vld [vmem:[%s348] ss:$2 sm:$0xff]
        %s350 = scalar_lea.vmem %s1, 16
        %v351 = vld [vmem:[%s350] sm:$0xff]
        %v353 = vsel %vm287, %v347, 0
        %v356 = vsel %vm287, %v349, 0
        %358 = vmatpush.msra.mxu0 0.0
        %359 = vmatpush.msra.mxu0 0.0
        %360 = vmatpush.msra.mxu0 0.0
        %361 = vmatpush.msra.mxu0 0.0
        %362 = vmatpush.msra.mxu0 0.0
        %363 = vmatpush.msra.mxu0 0.0
        %364 = vmatpush.msra.mxu0 0.0
        %365 = vmatpush.msra.mxu0 0.0
        %366 = vmatpush.msra.mxu0 0.0
        %367 = vmatpush.msra.mxu0 0.0
        %368 = vmatpush.msra.mxu0 0.0
        %369 = vmatpush.msra.mxu0 0.0
        %370 = vmatpush.msra.mxu0 0.0
        %371 = vmatpush.msra.mxu0 0.0
        %372 = vmatpush.msra.mxu0 0.0
        %373 = vmatpush.msra.mxu0 %v351
        %374 = vmatmul.f32.gmra.mxu0 %v353
        %v375 = vpop.f32.mrf.mxu0
        %v376 = vadd.f32 0.0, %v375
        %377 = vmatmul.f32.gmra.mxu0 %v356
        %v378 = vpop.f32.mrf.mxu0
        %v379 = vadd.f32 0.0, %v378
        %380 = vdwg.mxu0
        %v381 = vadd.f32 %v341, %v376
        %v382 = vadd.f32 %v344, %v379
        %v383 = vld [vmem:[%s2] sm:$0x1]
        %v385 = vperm.slane %v383, 0
        %v387 = vadd.f32 %v381, %v385
        %v388 = vadd.f32 %v382, %v385
        %v389 = vmax.f32 %v387, 0.0
        %v390 = vmax.f32 %v388, 0.0
        %vm391 = vcmask 130048
        %392 = vst.msk [vmem:[#allocation2] sm:$0xff] %vm391, 0.0
        %393 = vst.msk [vmem:[#allocation2 + $0x8] sm:$0xff] %vm391, 0.0
        %vm394 = vcmask 123904
        %395 = vst.msk [vmem:[#allocation2 + $0x10] sm:$0x3] %vm394, 0.0
        %396 = vst.msk [vmem:[#allocation2 + $0x1] sm:$0xff] %vm391, %v389
        %397 = vst.msk [vmem:[#allocation2 + $0x9] sm:$0xff] %vm391, %v390
        %v398 = vld [vmem:[#allocation2] sm:$0xff]
        %v399 = vld [vmem:[#allocation2 + $0x8] sm:$0xff]
        %v400 = vld [vmem:[%s3] sm:$0xff]
        %v401 = vld [vmem:[%s3 + $0x8] sm:$0xff]
        %v402 = vld [vmem:[#allocation2 + $0x1] sm:$0xff]
        %v403 = vld [vmem:[#allocation2 + $0x9] sm:$0xff]
        %s404 = scalar_lea.vmem %s3, 16
        %v405 = vld [vmem:[%s404] sm:$0xff]
        %v406 = vld [vmem:[%s404 + $0x8] sm:$0xff]
        %v408 = vsel %vm391, %v402, 0
        %v411 = vsel %vm391, %v403, 0
        %413 = vmatpush.msra.mxu0 0.0
        %414 = vmatpush.msra.mxu0 0.0
        %415 = vmatpush.msra.mxu0 0.0
        %416 = vmatpush.msra.mxu0 0.0
        %417 = vmatpush.msra.mxu0 0.0
        %418 = vmatpush.msra.mxu0 0.0
        %419 = vmatpush.msra.mxu0 0.0
        %420 = vmatpush.msra.mxu0 0.0
        %421 = vmatpush.msra.mxu0 0.0
        %422 = vmatpush.msra.mxu0 0.0
        %423 = vmatpush.msra.mxu0 0.0
        %424 = vmatpush.msra.mxu0 0.0
        %425 = vmatpush.msra.mxu0 0.0
        %426 = vmatpush.msra.mxu0 0.0
        %427 = vmatpush.msra.mxu0 %v406
        %428 = vmatpush.msra.mxu0 %v405
        %429 = vmatmul.f32.gmra.mxu0 %v408
        %v430 = vpop.f32.mrf.mxu0
        %v431 = vadd.f32 0.0, %v430
        %432 = vmatmul.f32.gmra.mxu0 %v411
        %v433 = vpop.f32.mrf.mxu0
        %v434 = vadd.f32 0.0, %v433
        %435 = vdwg.mxu0
        %v437 = vsel %vm391, %v398, 0
        %v440 = vsel %vm391, %v399, 0
        %442 = vmatpush.msra.mxu0 0.0
        %443 = vmatpush.msra.mxu0 0.0
        %444 = vmatpush.msra.mxu0 0.0
        %445 = vmatpush.msra.mxu0 0.0
        %446 = vmatpush.msra.mxu0 0.0
        %447 = vmatpush.msra.mxu0 0.0
        %448 = vmatpush.msra.mxu0 0.0
        %449 = vmatpush.msra.mxu0 0.0
        %450 = vmatpush.msra.mxu0 0.0
        %451 = vmatpush.msra.mxu0 0.0
        %452 = vmatpush.msra.mxu0 0.0
        %453 = vmatpush.msra.mxu0 0.0
        %454 = vmatpush.msra.mxu0 0.0
        %455 = vmatpush.msra.mxu0 0.0
        %456 = vmatpush.msra.mxu0 %v401
        %457 = vmatpush.msra.mxu0 %v400
        %458 = vmatmul.f32.gmra.mxu0 %v437
        %v459 = vpop.f32.mrf.mxu0
        %v460 = vadd.f32 %v431, %v459
        %461 = vmatmul.f32.gmra.mxu0 %v440
        %v462 = vpop.f32.mrf.mxu0
        %v463 = vadd.f32 %v434, %v462
        %464 = vdwg.mxu0
        %v465 = vld [vmem:[#allocation2 + $0x2] sm:$0xff]
        %v466 = vld [vmem:[#allocation2 + $0xa] sm:$0xff]
        %s467 = scalar_lea.vmem %s3, 32
        %v468 = vld [vmem:[%s467] sm:$0xff]
        %v469 = vld [vmem:[%s467 + $0x8] sm:$0xff]
        %v471 = vsel %vm391, %v465, 0
        %v474 = vsel %vm391, %v466, 0
        %476 = vmatpush.msra.mxu0 0.0
        %477 = vmatpush.msra.mxu0 0.0
        %478 = vmatpush.msra.mxu0 0.0
        %479 = vmatpush.msra.mxu0 0.0
        %480 = vmatpush.msra.mxu0 0.0
        %481 = vmatpush.msra.mxu0 0.0
        %482 = vmatpush.msra.mxu0 0.0
        %483 = vmatpush.msra.mxu0 0.0
        %484 = vmatpush.msra.mxu0 0.0
        %485 = vmatpush.msra.mxu0 0.0
        %486 = vmatpush.msra.mxu0 0.0
        %487 = vmatpush.msra.mxu0 0.0
        %488 = vmatpush.msra.mxu0 0.0
        %489 = vmatpush.msra.mxu0 0.0
        %490 = vmatpush.msra.mxu0 %v469
        %491 = vmatpush.msra.mxu0 %v468
        %492 = vmatmul.f32.gmra.mxu0 %v471
        %v493 = vpop.f32.mrf.mxu0
        %v494 = vadd.f32 0.0, %v493
        %495 = vmatmul.f32.gmra.mxu0 %v474
        %v496 = vpop.f32.mrf.mxu0
        %v497 = vadd.f32 0.0, %v496
        %498 = vdwg.mxu0
        %v499 = vadd.f32 %v460, %v494
        %v500 = vadd.f32 %v463, %v497
        %v501 = vld [vmem:[%s4] sm:$0x1]
        %v503 = vperm.slane %v501, 0
        %v505 = vadd.f32 %v499, %v503
        %v506 = vadd.f32 %v500, %v503
        %v507 = vld [vmem:[%s281] ss:$2 sm:$0xff]
        %v508 = vld [vmem:[%s283] ss:$2 sm:$0xff]
        %v509 = vld [vmem:[%s5] sm:$0xff]
        %v510 = vld [vmem:[%s6] sm:$0x1]
        %v512 = vperm.slane %v510, 0
        %v515 = vsel %vm287, %v507, 0
        %v518 = vsel %vm287, %v508, 0
        %520 = vmatpush.msra.mxu0 0.0
        %521 = vmatpush.msra.mxu0 0.0
        %522 = vmatpush.msra.mxu0 0.0
        %523 = vmatpush.msra.mxu0 0.0
        %524 = vmatpush.msra.mxu0 0.0
        %525 = vmatpush.msra.mxu0 0.0
        %526 = vmatpush.msra.mxu0 0.0
        %527 = vmatpush.msra.mxu0 0.0
        %528 = vmatpush.msra.mxu0 0.0
        %529 = vmatpush.msra.mxu0 0.0
        %530 = vmatpush.msra.mxu0 0.0
        %531 = vmatpush.msra.mxu0 0.0
        %532 = vmatpush.msra.mxu0 0.0
        %533 = vmatpush.msra.mxu0 0.0
        %534 = vmatpush.msra.mxu0 0.0
        %535 = vmatpush.msra.mxu0 %v509
        %536 = vmatmul.f32.gmra.mxu0 %v515
        %v537 = vpop.f32.mrf.mxu0
        %v538 = vadd.f32 %v512, %v537
        %539 = vmatmul.f32.gmra.mxu0 %v518
        %v540 = vpop.f32.mrf.mxu0
        %v541 = vadd.f32 %v512, %v540
        %542 = vdwg.mxu0
        %v543 = vadd.f32 %v505, %v538
        %v544 = vadd.f32 %v506, %v541
        %v545 = vmax.f32 %v543, 0.0
        %v546 = vmax.f32 %v544, 0.0
        %547 = vst.msk [vmem:[%s271] sm:$0xff] %vm391, %v545
        %548 = vst.msk [vmem:[%s271 + $0x8] sm:$0xff] %vm391, %v546
        %s549 = sand.u32 %s181, 1
        %s550 = scalar_lea.sflag [#allocation4], %s549
        %s551 = sand.u32 %s181, 1
        %s552 = smul.addr %s551, 16
        %s553 = scalar_lea.vmem [#allocation3], %s552
        // Predicated region
        $region49: #{tpu_custom_call.1} parent=47 // pred_check
          %p554 = pneg %p191
        $region50: #{tpu_custom_call.1} parent=47 // pred_check_branch
          %556 = sbr.rel (%p554) target = $region52
        $region51: #{tpu_custom_call.1} parent=47 // pred_region
          %558 = vsyncadd %s550, 0
          %s559 = smul.addr %s21, 2
          %s560 = smul.addr %s559, 8
          %s561 = scalar_lea.hbm %s7, %s560
          %s562 = sshll.u32 %s553, 4
          %s563 = int_to_ptr.vmem [resolvable:$true] %s562
          %s564 = sshll.u32 %s561, 4
          %s565 = int_to_ptr.hbm [resolvable:$true] %s564
          %570 = dma.vmem_to_hbm [thread:$0]  %s563, 256, %s565, %s550, 128, 128, 8
        $region52: #{tpu_custom_call.1} parent=47 // pred_fallthru
          _
      $region48: #{tpu_custom_call.1} parent=5 // pred_fallthru
        _
      %p571 = scmp.le.s32.totalorder 2, %s16
      // Predicated region
      $region53: #{tpu_custom_call.1} parent=5 // pred_check
        %p572 = pneg %p571
      $region54: #{tpu_custom_call.1} parent=5 // pred_check_branch
        %574 = sbr.rel (%p572) target = $region56
      $region55: #{tpu_custom_call.1} parent=5 // pred_region
        %s575 = ssub.s32 %s16, 2
        // Predicated region
        $region57: #{tpu_custom_call.1} parent=55 // pred_check
          %p576 = pneg %p197
        $region58: #{tpu_custom_call.1} parent=55 // pred_check_branch
          %578 = sbr.rel (%p576) target = $region60
        $region59: #{tpu_custom_call.1} parent=55 // pred_region
          %s579 = sand.u32 %s182, 1
          %s580 = scalar_lea.sflag [#allocation4], %s579
          %s581 = sand.u32 %s182, 1
          %s582 = smul.addr %s581, 16
          %s583 = scalar_lea.vmem [#allocation3], %s582
          %585 = dma.done %s580, 256
        $region60: #{tpu_custom_call.1} parent=55 // pred_fallthru
          _
      $region56: #{tpu_custom_call.1} parent=5 // pred_fallthru
        _
    $region6: #{tpu_custom_call.1} parent=1 // loop_footer
      %s20 = sadd.s32 1, %s16
    $region7: #{tpu_custom_call.1} parent=1 // loop_footer_branch
      %15 = sbr.rel target = $region3
    $region8: #{tpu_custom_call.1} parent=1 // loop_exit
      _
    %586 = vsyncpa [#allocation4], 1
    %s587 = scalar_lea.sflag [#allocation4], 1
    %588 = vsyncpa %s587, 1

</llo_original>
